<compile_context>
chip_gen: v5e
topology: v5e:2x2
jax: 0.10.0
libtpu: 0.0.40
codegen_flags: <defaults>
</compile_context>

<pallas_src>
import jax
import jax.numpy as jnp
from jax.experimental import pallas as pl
from jax.experimental.pallas import tpu as pltpu

LANE = 128


def _device_kind() -> str:
    try:
        return jax.devices()[0].device_kind.lower()
    except Exception:
        return ""


def _finalize(s_corr, s_true, s_pred):
    recall = s_corr / (s_true + 1e-8)
    precision = s_corr / (s_pred + 1e-8)
    f1 = 2.0 * recall * precision / (recall + precision + 1e-8)
    return recall, precision, f1


def _partial_sums_jax(pred_flat, true_flat):
    """Tiny (<128 element) tail reduction in plain JAX."""
    p = pred_flat.astype(jnp.float32)
    t = true_flat.astype(jnp.float32)
    t_one = jnp.where(t < 1.0, 0.0, 1.0)
    p_one = jnp.where(p < 1.0, 0.0, 1.0)
    corr = jnp.where(p == t, t_one, 0.0)
    return jnp.sum(corr), jnp.sum(t_one), jnp.sum(p_one)


def metrics_func_pallas(logits, labels):
    """Pallas TPU implementation of metrics_func.forward -> (recall, precision, f1)."""
    y_pred = jnp.reshape(logits, (-1,))
    y_true = jnp.reshape(labels, (-1,))          # keep original dtype; cast in-kernel
    n = y_pred.shape[0]

    rows = n // LANE
    tail = n - rows * LANE

    if rows == 0:
        # Whole input smaller than one lane row: pure-JAX path.
        return _finalize(*_partial_sums_jax(y_pred, y_true))

    if tail:
        # No jnp.pad: kernel processes the full (rows, 128) prefix, the <128
        # leftover elements go through the tiny JAX reduce below.
        pred2 = y_pred[: rows * LANE].reshape(rows, LANE)
        true2 = y_true[: rows * LANE].reshape(rows, LANE)
    else:
        pred2 = y_pred.reshape(rows, LANE)        # free bitcast reshape
        true2 = y_true.reshape(rows, LANE)

    # ---- generation-aware tuning -------------------------------------------
    kind = _device_kind()
    is_v7x = "v7" in kind
    big_tile = ("v6" in kind) or is_v7x           # v6e / v7x: bigger scoped VMEM & HBM BW
    max_tile_rows = 8192 if big_tile else 4096    # 4 MiB vs 2 MiB per input per step
    ncores = 2 if is_v7x else 1                   # leading grid axis only on 2-TC chips

    tile_rows = rows if rows <= max_tile_rows else max_tile_rows
    nblocks = pl.cdiv(rows, tile_rows)            # row-blocks of real data
    tpc = pl.cdiv(nblocks, ncores)                # row-blocks per core
    needs_mask = (rows % tile_rows != 0) or (ncores * tpc != nblocks)

    def kernel(pred_ref, true_ref, acc_ref):
        c = pl.program_id(0)
        i = pl.program_id(1)

        @pl.when(i == 0)
        def _init():
            acc_ref[...] = jnp.zeros_like(acc_ref)

        p = pred_ref[...].astype(jnp.float32)
        t = true_ref[...].astype(jnp.float32)

        def accumulate(mask=None):
            # torch.where(x < 1, 0, 1) -> selects produce clean 0/1 (NaN -> 1),
            # corr reuses t_one so there are no separate bool->f32 casts.
            t_one = jnp.where(t < 1.0, 0.0, 1.0)
            p_one = jnp.where(p < 1.0, 0.0, 1.0)
            corr = jnp.where(p == t, t_one, 0.0)
            if mask is not None:
                t_one = t_one * mask
                p_one = p_one * mask
                corr = corr * mask
            # Vectorized accumulation: sublane reduce to (1, 128), VPU add into VMEM.
            acc_ref[0, 0] += jnp.sum(corr, axis=0, keepdims=True)
            acc_ref[0, 1] += jnp.sum(t_one, axis=0, keepdims=True)
            acc_ref[0, 2] += jnp.sum(p_one, axis=0, keepdims=True)

        if not needs_mask:
            accumulate()
        else:
            base = (c * tpc + i) * tile_rows
            is_edge = base + tile_rows > rows     # partial last block or clamped duplicate

            @pl.when(jnp.logical_not(is_edge))
            def _fast():
                accumulate()

            @pl.when(is_edge)
            def _masked():
                row_iota = jax.lax.broadcasted_iota(jnp.int32, (tile_rows, LANE), 0)
                mask = (row_iota < (rows - base)).astype(jnp.float32)
                accumulate(mask)

    if needs_mask:
        def in_index(c, i):
            # Clamp so duplicated / trailing steps re-read the last valid block;
            # their contribution is zeroed by the masked path above.
            return (jnp.minimum(c * tpc + i, nblocks - 1), 0)
    else:
        def in_index(c, i):
            return (c * tpc + i, 0)

    compiler_kwargs = {}
    if tile_rows >= 8192:
        # 2 inputs x 2 pipeline buffers x 4 MiB = 16 MiB; give explicit headroom.
        compiler_kwargs["vmem_limit_bytes"] = 32 * 1024 * 1024

    if ncores > 1:
        lead_sem = getattr(pltpu, "CORE_PARALLEL", pltpu.PARALLEL)  # real 2-TC split on v7x
    else:
        lead_sem = pltpu.PARALLEL

    cost = pl.CostEstimate(
        flops=12 * rows * LANE,
        transcendentals=0,
        bytes_accessed=int(pred2.dtype.itemsize + true2.dtype.itemsize) * rows * LANE
        + ncores * 3 * LANE * 4,
    )

    acc = pl.pallas_call(
        kernel,
        out_shape=jax.ShapeDtypeStruct((ncores, 3, 1, LANE), jnp.float32),
        grid=(ncores, tpc),
        in_specs=[
            pl.BlockSpec((tile_rows, LANE), in_index),
            pl.BlockSpec((tile_rows, LANE), in_index),
        ],
        out_specs=pl.BlockSpec((1, 3, 1, LANE), lambda c, i: (c, 0, 0, 0)),
        compiler_params=pltpu.CompilerParams(
            dimension_semantics=(lead_sem, pltpu.ARBITRARY),
            **compiler_kwargs,
        ),
        cost_estimate=cost,
    )(pred2, true2)

    # Tiny final reduce (ncores*3*128 floats) in plain JAX.
    sums = jnp.sum(acc, axis=(0, 2, 3))
    s_corr, s_true, s_pred = sums[0], sums[1], sums[2]

    if tail:
        tc, tt, tp = _partial_sums_jax(y_pred[rows * LANE:], y_true[rows * LANE:])
        s_corr = s_corr + tc
        s_true = s_true + tt
        s_pred = s_pred + tp

    return _finalize(s_corr, s_true, s_pred)


def _metrics_ref(logits, labels):
    """Pure-JAX reference mirroring the PyTorch forward."""
    y_pred = jnp.reshape(logits, (-1,)).astype(jnp.float32)
    y_true = jnp.reshape(labels, (-1,)).astype(jnp.float32)
    y_true_one = jnp.where(y_true < 1.0, 0.0, 1.0)
    y_pred_one = jnp.where(y_pred < 1.0, 0.0, 1.0)
    corr = (y_pred == y_true).astype(jnp.float32) * y_true_one
    recall = jnp.sum(corr) / (jnp.sum(y_true_one) + 1e-8)
    precision = jnp.sum(corr) / (jnp.sum(y_pred_one) + 1e-8)
    f1 = 2.0 * recall * precision / (recall + precision + 1e-8)
    return recall, precision, f1


if __name__ == "__main__":
    key = jax.random.PRNGKey(0)
    k1, k2 = jax.random.split(key)
    # logits interpreted as hard class predictions (integer-valued), labels are class IDs
    logits = jax.random.randint(k1, (2, 4, 16, 16), 0, 3).astype(jnp.float32)
    labels = jax.random.randint(k2, (2, 4, 16, 16), 0, 3)   # int32, cast inside kernel

    recall, precision, f1 = metrics_func_pallas(logits, labels)
    jax.block_until_ready((recall, precision, f1))

    r_ref, p_ref, f_ref = _metrics_ref(logits, labels)
    assert jnp.allclose(recall, r_ref, atol=1e-5)
    assert jnp.allclose(precision, p_ref, atol=1e-5)
    assert jnp.allclose(f1, f_ref, atol=1e-5)

    # Exercise the non-lane-aligned path (tail handled without jnp.pad).
    logits_t = jax.random.randint(k1, (3, 5, 7, 11), 0, 3).astype(jnp.float32)
    labels_t = jax.random.randint(k2, (3, 5, 7, 11), 0, 3)
    out_t = metrics_func_pallas(logits_t, labels_t)
    jax.block_until_ready(out_t)
    ref_t = _metrics_ref(logits_t, labels_t)
    for a, b in zip(out_t, ref_t):
        assert jnp.allclose(a, b, atol=1e-5)

    print("KERNEL_OK")
</pallas_src>

<mosaic_0001>
module attributes {stable_mosaic.version = 11 : i64} {
  func.func @kernel(%arg0: i32, %arg1: i32, %arg2: memref<16x128xf32, #tpu.memory_space<vmem>>, %arg3: memref<16x128xi32, #tpu.memory_space<vmem>>, %arg4: memref<1x3x1x128xf32, #tpu.memory_space<vmem>>) attributes {dimension_semantics = [#tpu.dimension_semantics<parallel>, #tpu.dimension_semantics<arbitrary>], iteration_bounds = array<i64: 1, 1>, scalar_prefetch = 0 : i64, scratch_operands = 0 : i64, tpu.core_type = #tpu.core_type<tc>, window_params = [{transform_indices = @transform_0, window_bounds = array<i64: 16, 128>}, {transform_indices = @transform_1, window_bounds = array<i64: 16, 128>}, {transform_indices = @transform_2, window_bounds = array<i64: 1, 3, 1, 128>}]} {
    %c0_i32 = arith.constant 0 : i32
    %0 = arith.cmpi eq, %arg1, %c0_i32 : i32
    %1 = arith.extui %0 : i1 to i32
    %c0_i32_0 = arith.constant 0 : i32
    %2 = arith.cmpi ne, %1, %c0_i32_0 : i32
    scf.if %2 {
      %cst_35 = arith.constant 0.000000e+00 : f32
      %43 = vector.broadcast %cst_35 : f32 to vector<1x3x1x128xf32>
      %c0_36 = arith.constant 0 : index
      %c0_37 = arith.constant 0 : index
      %c0_38 = arith.constant 0 : index
      %c0_39 = arith.constant 0 : index
      %44 = vector.load %arg4[%c0_36, %c0_37, %c0_38, %c0_39] : memref<1x3x1x128xf32, #tpu.memory_space<vmem>>, vector<1x3x1x128xf32>
      tpu.vector_store %arg4[%c0_36, %c0_37, %c0_38, %c0_39], %43 {strides = array<i32>} : memref<1x3x1x128xf32, #tpu.memory_space<vmem>>, vector<1x3x1x128xf32>,
    } else {
    }
    %c0 = arith.constant 0 : index
    %c0_1 = arith.constant 0 : index
    %3 = vector.load %arg2[%c0, %c0_1] : memref<16x128xf32, #tpu.memory_space<vmem>>, vector<16x128xf32>
    %c0_2 = arith.constant 0 : index
    %c0_3 = arith.constant 0 : index
    %4 = vector.load %arg3[%c0_2, %c0_3] : memref<16x128xi32, #tpu.memory_space<vmem>>, vector<16x128xi32>
    %5 = arith.sitofp %4 : vector<16x128xi32> to vector<16x128xf32>
    %cst = arith.constant 1.000000e+00 : f32
    %6 = vector.broadcast %cst : f32 to vector<16x128xf32>
    %7 = arith.cmpf olt, %5, %6 : vector<16x128xf32>
    %cst_4 = arith.constant 0.000000e+00 : f32
    %cst_5 = arith.constant 1.000000e+00 : f32
    %8 = vector.broadcast %cst_4 : f32 to vector<16x128xf32>
    %9 = vector.broadcast %cst_5 : f32 to vector<16x128xf32>
    %10 = arith.select %7, %8, %9 : vector<16x128xi1>, vector<16x128xf32>
    %cst_6 = arith.constant 1.000000e+00 : f32
    %11 = vector.broadcast %cst_6 : f32 to vector<16x128xf32>
    %12 = arith.cmpf olt, %3, %11 : vector<16x128xf32>
    %cst_7 = arith.constant 0.000000e+00 : f32
    %cst_8 = arith.constant 1.000000e+00 : f32
    %13 = vector.broadcast %cst_7 : f32 to vector<16x128xf32>
    %14 = vector.broadcast %cst_8 : f32 to vector<16x128xf32>
    %15 = arith.select %12, %13, %14 : vector<16x128xi1>, vector<16x128xf32>
    %16 = arith.cmpf oeq, %3, %5 : vector<16x128xf32>
    %cst_9 = arith.constant 0.000000e+00 : f32
    %17 = vector.broadcast %cst_9 : f32 to vector<16x128xf32>
    %18 = arith.select %16, %10, %17 : vector<16x128xi1>, vector<16x128xf32>
    %c0_10 = arith.constant 0 : index
    %c0_11 = arith.constant 0 : index
    %c0_12 = arith.constant 0 : index
    %c0_13 = arith.constant 0 : index
    %19 = vector.load %arg4[%c0_10, %c0_11, %c0_12, %c0_13] : memref<1x3x1x128xf32, #tpu.memory_space<vmem>>, vector<1x1x1x128xf32>
    %20 = vector.shape_cast %19 : vector<1x1x1x128xf32> to vector<1x128xf32>
    %cst_14 = arith.constant dense<0.000000e+00> : vector<128xf32>
    %21 = vector.multi_reduction <add>, %18, %cst_14 [0] : vector<16x128xf32> to vector<128xf32>
    %22 = vector.shape_cast %21 : vector<128xf32> to vector<1x128xf32>
    %23 = arith.addf %20, %22 : vector<1x128xf32>
    %c0_15 = arith.constant 0 : index
    %c0_16 = arith.constant 0 : index
    %c0_17 = arith.constant 0 : index
    %c0_18 = arith.constant 0 : index
    %24 = vector.load %arg4[%c0_15, %c0_16, %c0_17, %c0_18] : memref<1x3x1x128xf32, #tpu.memory_space<vmem>>, vector<1x1x1x128xf32>
    %25 = vector.shape_cast %24 : vector<1x1x1x128xf32> to vector<1x128xf32>
    %26 = vector.shape_cast %23 : vector<1x128xf32> to vector<1x1x1x128xf32>
    tpu.vector_store %arg4[%c0_15, %c0_16, %c0_17, %c0_18], %26 {strides = array<i32>} : memref<1x3x1x128xf32, #tpu.memory_space<vmem>>, vector<1x1x1x128xf32>,
    %c0_19 = arith.constant 0 : index
    %c1 = arith.constant 1 : index
    %c0_20 = arith.constant 0 : index
    %c0_21 = arith.constant 0 : index
    %27 = vector.load %arg4[%c0_19, %c1, %c0_20, %c0_21] : memref<1x3x1x128xf32, #tpu.memory_space<vmem>>, vector<1x1x1x128xf32>
    %28 = vector.shape_cast %27 : vector<1x1x1x128xf32> to vector<1x128xf32>
    %cst_22 = arith.constant dense<0.000000e+00> : vector<128xf32>
    %29 = vector.multi_reduction <add>, %10, %cst_22 [0] : vector<16x128xf32> to vector<128xf32>
    %30 = vector.shape_cast %29 : vector<128xf32> to vector<1x128xf32>
    %31 = arith.addf %28, %30 : vector<1x128xf32>
    %c0_23 = arith.constant 0 : index
    %c1_24 = arith.constant 1 : index
    %c0_25 = arith.constant 0 : index
    %c0_26 = arith.constant 0 : index
    %32 = vector.load %arg4[%c0_23, %c1_24, %c0_25, %c0_26] : memref<1x3x1x128xf32, #tpu.memory_space<vmem>>, vector<1x1x1x128xf32>
    %33 = vector.shape_cast %32 : vector<1x1x1x128xf32> to vector<1x128xf32>
    %34 = vector.shape_cast %31 : vector<1x128xf32> to vector<1x1x1x128xf32>
    tpu.vector_store %arg4[%c0_23, %c1_24, %c0_25, %c0_26], %34 {strides = array<i32>} : memref<1x3x1x128xf32, #tpu.memory_space<vmem>>, vector<1x1x1x128xf32>,
    %c0_27 = arith.constant 0 : index
    %c2 = arith.constant 2 : index
    %c0_28 = arith.constant 0 : index
    %c0_29 = arith.constant 0 : index
    %35 = vector.load %arg4[%c0_27, %c2, %c0_28, %c0_29] : memref<1x3x1x128xf32, #tpu.memory_space<vmem>>, vector<1x1x1x128xf32>
    %36 = vector.shape_cast %35 : vector<1x1x1x128xf32> to vector<1x128xf32>
    %cst_30 = arith.constant dense<0.000000e+00> : vector<128xf32>
    %37 = vector.multi_reduction <add>, %15, %cst_30 [0] : vector<16x128xf32> to vector<128xf32>
    %38 = vector.shape_cast %37 : vector<128xf32> to vector<1x128xf32>
    %39 = arith.addf %36, %38 : vector<1x128xf32>
    %c0_31 = arith.constant 0 : index
    %c2_32 = arith.constant 2 : index
    %c0_33 = arith.constant 0 : index
    %c0_34 = arith.constant 0 : index
    %40 = vector.load %arg4[%c0_31, %c2_32, %c0_33, %c0_34] : memref<1x3x1x128xf32, #tpu.memory_space<vmem>>, vector<1x1x1x128xf32>
    %41 = vector.shape_cast %40 : vector<1x1x1x128xf32> to vector<1x128xf32>
    %42 = vector.shape_cast %39 : vector<1x128xf32> to vector<1x1x1x128xf32>
    tpu.vector_store %arg4[%c0_31, %c2_32, %c0_33, %c0_34], %42 {strides = array<i32>} : memref<1x3x1x128xf32, #tpu.memory_space<vmem>>, vector<1x1x1x128xf32>,
    return
  }
  func.func @transform_0(%arg0: i32, %arg1: i32) -> (i32, i32) {
    %c1_i32 = arith.constant 1 : i32
    %0 = arith.muli %arg0, %c1_i32 : i32
    %1 = arith.addi %0, %arg1 : i32
    %c0_i32 = arith.constant 0 : i32
    %c0_i32_0 = arith.constant 0 : i32
    return %1, %c0_i32 : i32, i32
  }
  func.func @transform_1(%arg0: i32, %arg1: i32) -> (i32, i32) {
    %c1_i32 = arith.constant 1 : i32
    %0 = arith.muli %arg0, %c1_i32 : i32
    %1 = arith.addi %0, %arg1 : i32
    %c0_i32 = arith.constant 0 : i32
    %c0_i32_0 = arith.constant 0 : i32
    return %1, %c0_i32 : i32, i32
  }
  func.func @transform_2(%arg0: i32, %arg1: i32) -> (i32, i32, i32, i32) {
    %c0_i32 = arith.constant 0 : i32
    %c0_i32_0 = arith.constant 0 : i32
    %c0_i32_1 = arith.constant 0 : i32
    %c0_i32_2 = arith.constant 0 : i32
    return %arg0, %c0_i32, %c0_i32_0, %c0_i32_1 : i32, i32, i32, i32
  }
}

</mosaic_0001>

<llo_original>
// kernel: tpu_custom_call.1
$region0: #{tpu_custom_call.1}
  #allocation0 [shape = 'u32[]', space=smem, size = 0x4, offset = 0x4, fixed_abs, tag = 'smem constant byte address 0x4 - core index']
  #allocation1 [shape = 'u32[72,128]{1,0:T(1,128)}', space=vmem, size = 0x9000, scoped, tag = 'internal scratch']
  %s0 = inlined_call_operand.hbm [shape: f32[16,128], index: 0, kind: input, shape index: {}]
  %s1 = inlined_call_operand.hbm [shape: s32[16,128], index: 1, kind: input, shape index: {}]
  %s2 = inlined_call_operand.hbm [shape: f32[1,3,1,128], index: 2, kind: output, shape index: {}]
  %s3 = sld [smem:[#allocation0]]
  $region30: #{tpu_custom_call.1} parent=0
    _
  %s5 = ssub.s32 1, %s3
  %s6 = scalar_select 0, %s5, %s3
  $region1: #{tpu_custom_call.1} parent=0
    #allocation2 [shape = 'u8[8192]{0}', space=vmem, size = 0x2000, scoped, tag = 'input window, operand 0, single buffered']
    #allocation3 [shape = 's32[1]{0}', space=sflag, size = 0x4, scoped, tag = 'scoped memory for tpu_custom_call.1']
    #allocation4 [shape = 's32[1]{0}', space=sflag, size = 0x4, scoped, tag = 'scoped memory for tpu_custom_call.1']
    #allocation5 [shape = 'u8[8192]{0}', space=vmem, size = 0x2000, scoped, tag = 'input window, operand 1, single buffered']
    #allocation6 [shape = 's32[1]{0}', space=sflag, size = 0x4, scoped, tag = 'scoped memory for tpu_custom_call.1']
    #allocation7 [shape = 'u8[1536]{0}', space=vmem, size = 0x800, scoped, tag = 'output window, operand 0, single buffered']
    %7 = vsyncpa [#allocation3], 0
    %8 = vsyncpa [#allocation6], 0
    %9 = vsyncpa [#allocation4], 0
    // Predicated region
    $region2: #{tpu_custom_call.1} parent=1 // pred_check
      _
    $region3: #{tpu_custom_call.1} parent=1 // pred_check_branch
      %11 = sbr.rel (0) target = $region5
    $region4: #{tpu_custom_call.1} parent=1 // pred_region
      %s12 = sadd.s32 0, 0
      %s13 = smul.u32 2, %s12
      %15 = vsyncadd [#allocation3], 0
      %s16 = smul.addr %s13, 8
      %s17 = scalar_lea.hbm %s0, %s16
      %s18 = sshll.u32 %s17, 4
      %s19 = int_to_ptr.hbm [resolvable:$true] %s18
      %s20 = sshll.u32 [#allocation2], 4
      %s21 = int_to_ptr.vmem [resolvable:$true] %s20
      %26 = dma.hbm_to_vmem [thread:$0]  %s19, 256, %s21, [#allocation3], 128, 128, 8
    $region5: #{tpu_custom_call.1} parent=1 // pred_fallthru
      _
    // Predicated region
    $region6: #{tpu_custom_call.1} parent=1 // pred_check
      _
    $region7: #{tpu_custom_call.1} parent=1 // pred_check_branch
      %28 = sbr.rel (0) target = $region9
    $region8: #{tpu_custom_call.1} parent=1 // pred_region
      %s29 = sadd.s32 0, 0
      %s30 = smul.u32 2, %s29
      %32 = vsyncadd [#allocation6], 0
      %s33 = smul.addr %s30, 8
      %s34 = scalar_lea.hbm %s1, %s33
      %s35 = sshll.u32 %s34, 4
      %s36 = int_to_ptr.hbm [resolvable:$true] %s35
      %s37 = sshll.u32 [#allocation5], 4
      %s38 = int_to_ptr.vmem [resolvable:$true] %s37
      %43 = dma.hbm_to_vmem [thread:$0]  %s36, 256, %s38, [#allocation6], 128, 128, 8
    $region9: #{tpu_custom_call.1} parent=1 // pred_fallthru
      _
    // Predicated region
    $region10: #{tpu_custom_call.1} parent=1 // pred_check
      _
    $region11: #{tpu_custom_call.1} parent=1 // pred_check_branch
      %45 = sbr.rel (0) target = $region13
    $region12: #{tpu_custom_call.1} parent=1 // pred_region
      %47 = dma.done [#allocation3], 256
    $region13: #{tpu_custom_call.1} parent=1 // pred_fallthru
      _
    // Predicated region
    $region14: #{tpu_custom_call.1} parent=1 // pred_check
      _
    $region15: #{tpu_custom_call.1} parent=1 // pred_check_branch
      %49 = sbr.rel (0) target = $region17
    $region16: #{tpu_custom_call.1} parent=1 // pred_region
      %51 = dma.done [#allocation6], 256
    $region17: #{tpu_custom_call.1} parent=1 // pred_fallthru
      _
    %s52 = sadd.s32 0, 0
    %s53 = smul.u32 2, %s52
    %s54 = sadd.s32 0, 0
    %s55 = smul.u32 2, %s54
    %p56 = scmp.eq.s32.totalorder 0, 0
    // Predicated region
    $region18: #{tpu_custom_call.1} parent=1 // pred_check
      %p57 = pneg %p56
    $region19: #{tpu_custom_call.1} parent=1 // pred_check_branch
      %59 = sbr.rel (%p57) target = $region21
    $region20: #{tpu_custom_call.1} parent=1 // pred_region
      %60 = vst [vmem:[#allocation7] sm:$0x1] 0.0
      %61 = vst [vmem:[#allocation7 + $0x1] sm:$0x1] 0.0
      %62 = vst [vmem:[#allocation7 + $0x2] sm:$0x1] 0.0
    $region21: #{tpu_custom_call.1} parent=1 // pred_fallthru
      _
    %v63 = vld [vmem:[#allocation2] sm:$0xff]
    %v64 = vld [vmem:[#allocation2 + $0x8] sm:$0xff]
    %v65 = vld [vmem:[#allocation5] sm:$0xff]
    %v66 = vld [vmem:[#allocation5 + $0x8] sm:$0xff]
    %v67 = vcvt.s32.f32 %v65
    %v68 = vcvt.s32.f32 %v66
    %vm69 = vcmp.lt.f32.partialorder %v67, 1.0
    %vm70 = vcmp.lt.f32.partialorder %v68, 1.0
    %v71 = vsel %vm69, 0.0, 1.0
    %v72 = vsel %vm70, 0.0, 1.0
    %vm73 = vcmp.lt.f32.partialorder %v63, 1.0
    %vm74 = vcmp.lt.f32.partialorder %v64, 1.0
    %v75 = vsel %vm73, 0.0, 1.0
    %v76 = vsel %vm74, 0.0, 1.0
    %vm77 = vcmp.eq.f32.partialorder %v63, %v67
    %vm78 = vcmp.eq.f32.partialorder %v64, %v68
    %v79 = vsel %vm77, %v71, 0.0
    %v80 = vsel %vm78, %v72, 0.0
    %v81 = vld [vmem:[#allocation7] sm:$0x1]
    %v82 = vadd.f32 %v79, %v80
    %v83 = vrot.slane %v82, 4
    %v84 = vadd.f32 %v82, %v83
    %v85 = vrot.slane %v84, 2
    %v86 = vadd.f32 %v84, %v85
    %v87 = vrot.slane %v86, 1
    %v88 = vadd.f32 %v86, %v87
    %v89 = vadd.f32 %v81, %v88
    %90 = vst [vmem:[#allocation7] sm:$0x1] %v89
    %s91 = scalar_lea.vmem [#allocation7], 1
    %v92 = vld [vmem:[%s91] sm:$0x1]
    %v93 = vadd.f32 %v71, %v72
    %v94 = vrot.slane %v93, 4
    %v95 = vadd.f32 %v93, %v94
    %v96 = vrot.slane %v95, 2
    %v97 = vadd.f32 %v95, %v96
    %v98 = vrot.slane %v97, 1
    %v99 = vadd.f32 %v97, %v98
    %v100 = vadd.f32 %v92, %v99
    %101 = vst [vmem:[%s91] sm:$0x1] %v100
    %s102 = scalar_lea.vmem [#allocation7], 2
    %v103 = vld [vmem:[%s102] sm:$0x1]
    %v104 = vadd.f32 %v75, %v76
    %v105 = vrot.slane %v104, 4
    %v106 = vadd.f32 %v104, %v105
    %v107 = vrot.slane %v106, 2
    %v108 = vadd.f32 %v106, %v107
    %v109 = vrot.slane %v108, 1
    %v110 = vadd.f32 %v108, %v109
    %v111 = vadd.f32 %v103, %v110
    %112 = vst [vmem:[%s102] sm:$0x1] %v111
    // Predicated region
    $region22: #{tpu_custom_call.1} parent=1 // pred_check
      _
    $region23: #{tpu_custom_call.1} parent=1 // pred_check_branch
      %114 = sbr.rel (0) target = $region25
    $region24: #{tpu_custom_call.1} parent=1 // pred_region
      %116 = vsyncadd [#allocation4], 0
      %s117 = sshll.u32 [#allocation7], 4
      %s118 = int_to_ptr.vmem [resolvable:$true] %s117
      %s119 = sshll.u32 %s2, 4
      %s120 = int_to_ptr.hbm [resolvable:$true] %s119
      %125 = dma.vmem_to_hbm [thread:$0]  %s118, 48, %s120, [#allocation4], 16, 16, 1
    $region25: #{tpu_custom_call.1} parent=1 // pred_fallthru
      _
    // Predicated region
    $region26: #{tpu_custom_call.1} parent=1 // pred_check
      _
    $region27: #{tpu_custom_call.1} parent=1 // pred_check_branch
      %127 = sbr.rel (0) target = $region29
    $region28: #{tpu_custom_call.1} parent=1 // pred_region
      %129 = dma.done [#allocation4], 48
    $region29: #{tpu_custom_call.1} parent=1 // pred_fallthru
      _
    %130 = vsyncpa [#allocation3], 1
    %131 = vsyncpa [#allocation6], 1
    %132 = vsyncpa [#allocation4], 1

</llo_original>
